<compile_context>
chip_gen: v7x
topology: tpu7x:2x2x1
jax: 0.10.0
libtpu: 0.0.40
codegen_flags: <defaults>
</compile_context>

<pallas_src>
import functools

import jax
import jax.numpy as jnp
from jax.experimental import pallas as pl
from jax.experimental.pallas import tpu as pltpu

LAYER_NORM_EPS = 1e-12  # BERT default


def _bert_output_kernel(h_ref, res_ref, w_ref, b_ref, g_ref, beta_ref, o_ref, *, eps):
    # h_ref:    (tm, K)  intermediate activations tile (matmul dtype, e.g. bf16)
    # res_ref:  (tm, H)  residual (input_tensor) tile
    # w_ref:    (K,  H)  dense weight [in, out] (matmul dtype, resident across the grid)
    # b_ref:    (1,  H)  dense bias (f32)
    # g_ref:    (1,  H)  LayerNorm gamma (f32)
    # beta_ref: (1,  H)  LayerNorm beta (f32)
    # o_ref:    (tm, H)  output tile
    x = jnp.dot(h_ref[...], w_ref[...], preferred_element_type=jnp.float32)
    x = x + b_ref[...]
    # TODO(synk): dropout is identity in eval mode; training-mode dropout not implemented.
    x = x + res_ref[...].astype(jnp.float32)

    mean = jnp.mean(x, axis=-1, keepdims=True)
    centered = x - mean
    var = jnp.mean(centered * centered, axis=-1, keepdims=True)
    normed = centered * jax.lax.rsqrt(var + eps)
    y = normed * g_ref[...] + beta_ref[...]
    o_ref[...] = y.astype(o_ref.dtype)


def _pick_row_tile(M, tm_max):
    """Largest row tile <= tm_max that divides M and keeps sublane alignment."""
    tm_max = max(8, min(int(tm_max), M))
    for step in (16, 8):  # prefer multiples of 16 (bf16 sublane packing), then 8
        tm = (tm_max // step) * step
        while tm >= step:
            if M % tm == 0:
                return tm
            tm -= step
    return M  # fall back to one full-M block (block dim == full array dim is legal)


def _default_row_tile(M, K, H, h_bytes, res_bytes, out_bytes, w_bytes,
                      budget_bytes=24 * 1024 * 1024):
    """Derive the row tile from a conservative VMEM budget (fits the 32 MiB scoped
    default on v6e/v7x with headroom; v5e/v6e's 128 MiB physical is never a concern)."""
    resident = 2 * K * H * w_bytes + 4 * H * 4            # double-buffered weight + bias/gamma/beta
    avail = max(budget_bytes - resident, 2 * 1024 * 1024)
    per_row = 2 * (K * h_bytes + H * res_bytes + H * out_bytes)  # double-buffered activation tiles
    tm_max = max(16, min(1024, avail // per_row))
    # keep at least 2 grid steps when M allows it so both v7x TensorCores get work
    if M >= 32 and tm_max > M // 2:
        tm_max = M // 2
    return _pick_row_tile(M, tm_max)


def bert_output(hidden_states, input_tensor, weight, bias, gamma, beta,
                *, eps=LAYER_NORM_EPS, tm=None, matmul_dtype=jnp.bfloat16,
                vmem_limit_bytes=64 * 1024 * 1024):
    """hidden_states: [B, S, K], input_tensor: [B, S, H], weight: [K, H] -> [B, S, H]."""
    B, S, K = hidden_states.shape
    H = input_tensor.shape[-1]
    M = B * S
    out_dtype = input_tensor.dtype

    # bf16 matmul operands (MXU-native), f32 accumulation + f32 LayerNorm math.
    h2 = hidden_states.reshape(M, K).astype(matmul_dtype)
    w2 = weight.astype(matmul_dtype)
    r2 = input_tensor.reshape(M, H)
    b2 = bias.reshape(1, H).astype(jnp.float32)
    g2 = gamma.reshape(1, H).astype(jnp.float32)
    be2 = beta.reshape(1, H).astype(jnp.float32)

    if tm is None:
        tm = _default_row_tile(
            M, K, H,
            h_bytes=h2.dtype.itemsize,
            res_bytes=r2.dtype.itemsize,
            out_bytes=jnp.dtype(out_dtype).itemsize,
            w_bytes=w2.dtype.itemsize)
    assert M % tm == 0, "row tile must divide B*S"

    kernel = functools.partial(_bert_output_kernel, eps=eps)

    out = pl.pallas_call(
        kernel,
        out_shape=jax.ShapeDtypeStruct((M, H), out_dtype),
        grid_spec=pltpu.PrefetchScalarGridSpec(
            num_scalar_prefetch=0,
            grid=(M // tm,),
            in_specs=[
                pl.BlockSpec((tm, K), lambda i: (i, 0)),   # hidden_states tile (bf16)
                pl.BlockSpec((tm, H), lambda i: (i, 0)),   # residual tile
                pl.BlockSpec((K, H), lambda i: (0, 0)),    # dense weight, resident (constant index)
                pl.BlockSpec((1, H), lambda i: (0, 0)),    # dense bias
                pl.BlockSpec((1, H), lambda i: (0, 0)),    # LN gamma
                pl.BlockSpec((1, H), lambda i: (0, 0)),    # LN beta
            ],
            out_specs=pl.BlockSpec((tm, H), lambda i: (i, 0)),  # lane-dense [M, H] output
        ),
        compiler_params=pltpu.CompilerParams(
            dimension_semantics=("parallel",),
            vmem_limit_bytes=vmem_limit_bytes),
    )(h2, r2, w2, b2, g2, be2)
    return out.reshape(B, S, H)


def _reference(hidden_states, input_tensor, weight, bias, gamma, beta,
               eps=LAYER_NORM_EPS, matmul_dtype=jnp.bfloat16):
    h = hidden_states.astype(matmul_dtype)
    w = weight.astype(matmul_dtype)
    x = jnp.einsum("bsk,kh->bsh", h, w, preferred_element_type=jnp.float32)
    x = x + bias.astype(jnp.float32)
    x = x + input_tensor.astype(jnp.float32)
    mean = jnp.mean(x, axis=-1, keepdims=True)
    var = jnp.mean((x - mean) ** 2, axis=-1, keepdims=True)
    y = (x - mean) * jax.lax.rsqrt(var + eps) * gamma + beta
    return y.astype(input_tensor.dtype)


if __name__ == "__main__":
    # Small config: batch=2, seq=8, hidden=32, intermediate=128
    B, S, H, K = 2, 8, 32, 128

    key = jax.random.PRNGKey(0)
    k1, k2, k3, k4 = jax.random.split(key, 4)

    hidden_states = jax.random.normal(k1, (B, S, K), dtype=jnp.float32)
    input_tensor = jax.random.normal(k2, (B, S, H), dtype=jnp.float32)

    # Deterministic parameter init (dense: intermediate_size -> hidden_size)
    weight = jax.random.normal(k3, (K, H), dtype=jnp.float32) * 0.02   # [in, out]
    bias = jax.random.normal(k4, (H,), dtype=jnp.float32) * 0.02
    gamma = jnp.ones((H,), dtype=jnp.float32)
    beta = jnp.zeros((H,), dtype=jnp.float32)

    out = bert_output(hidden_states, input_tensor, weight, bias, gamma, beta)
    out = jax.block_until_ready(out)

    ref = _reference(hidden_states, input_tensor, weight, bias, gamma, beta)
    assert out.shape == (B, S, H)
    assert jnp.allclose(out, ref, atol=1e-2, rtol=1e-2), "mismatch vs reference"

    print("KERNEL_OK")
</pallas_src>

<mosaic_0001>
module attributes {stable_mosaic.version = 11 : i64} {
  func.func @_bert_output_kernel(%arg0: i32, %arg1: memref<16x128xbf16, #tpu.memory_space<vmem>>, %arg2: memref<16x32xf32, #tpu.memory_space<vmem>>, %arg3: memref<128x32xbf16, #tpu.memory_space<vmem>>, %arg4: memref<1x32xf32, #tpu.memory_space<vmem>>, %arg5: memref<1x32xf32, #tpu.memory_space<vmem>>, %arg6: memref<1x32xf32, #tpu.memory_space<vmem>>, %arg7: memref<16x32xf32, #tpu.memory_space<vmem>>) attributes {dimension_semantics = [#tpu.dimension_semantics<parallel>], iteration_bounds = array<i64: 1>, scalar_prefetch = 0 : i64, scratch_operands = 0 : i64, tpu.core_type = #tpu.core_type<tc>, window_params = [{transform_indices = @transform_0, window_bounds = array<i64: 16, 128>}, {transform_indices = @transform_1, window_bounds = array<i64: 16, 32>}, {pipeline_mode = #tpu.pipeline_mode<synchronous>, transform_indices = @transform_2, window_bounds = array<i64: 128, 32>}, {pipeline_mode = #tpu.pipeline_mode<synchronous>, transform_indices = @transform_3, window_bounds = array<i64: 1, 32>}, {pipeline_mode = #tpu.pipeline_mode<synchronous>, transform_indices = @transform_4, window_bounds = array<i64: 1, 32>}, {pipeline_mode = #tpu.pipeline_mode<synchronous>, transform_indices = @transform_5, window_bounds = array<i64: 1, 32>}, {transform_indices = @transform_6, window_bounds = array<i64: 16, 32>}]} {
    %c0 = arith.constant 0 : index
    %c0_0 = arith.constant 0 : index
    %0 = vector.load %arg1[%c0, %c0_0] : memref<16x128xbf16, #tpu.memory_space<vmem>>, vector<16x128xbf16>
    %c0_1 = arith.constant 0 : index
    %c0_2 = arith.constant 0 : index
    %1 = vector.load %arg3[%c0_1, %c0_2] : memref<128x32xbf16, #tpu.memory_space<vmem>>, vector<128x32xbf16>
    %cst = arith.constant dense<0.000000e+00> : vector<16x32xf32>
    %2 = tpu.matmul %0, %1, %cst {dimension_numbers = #tpu.dot_dimension_numbers<[1], [0], [0], [1], [0, 0, 1, 1], [], []>} : vector<16x128xbf16>, vector<128x32xbf16>, vector<16x32xf32> -> vector<16x32xf32>
    %c0_3 = arith.constant 0 : index
    %c0_4 = arith.constant 0 : index
    %3 = vector.load %arg4[%c0_3, %c0_4] : memref<1x32xf32, #tpu.memory_space<vmem>>, vector<1x32xf32>
    %4 = vector.broadcast %3 : vector<1x32xf32> to vector<16x32xf32>
    %5 = arith.addf %2, %4 : vector<16x32xf32>
    %c0_5 = arith.constant 0 : index
    %c0_6 = arith.constant 0 : index
    %6 = vector.load %arg2[%c0_5, %c0_6] : memref<16x32xf32, #tpu.memory_space<vmem>>, vector<16x32xf32>
    %7 = arith.addf %5, %6 : vector<16x32xf32>
    %cst_7 = arith.constant dense<0.000000e+00> : vector<16xf32>
    %8 = vector.multi_reduction <add>, %7, %cst_7 [1] : vector<16x32xf32> to vector<16xf32>
    %9 = vector.shape_cast %8 : vector<16xf32> to vector<16x1xf32>
    %cst_8 = arith.constant 3.200000e+01 : f32
    %10 = vector.broadcast %cst_8 : f32 to vector<16x1xf32>
    %11 = arith.divf %9, %10 : vector<16x1xf32>
    %12 = vector.broadcast %11 : vector<16x1xf32> to vector<16x32xf32>
    %13 = arith.subf %7, %12 : vector<16x32xf32>
    %14 = arith.mulf %13, %13 : vector<16x32xf32>
    %cst_9 = arith.constant dense<0.000000e+00> : vector<16xf32>
    %15 = vector.multi_reduction <add>, %14, %cst_9 [1] : vector<16x32xf32> to vector<16xf32>
    %16 = vector.shape_cast %15 : vector<16xf32> to vector<16x1xf32>
    %cst_10 = arith.constant 3.200000e+01 : f32
    %17 = vector.broadcast %cst_10 : f32 to vector<16x1xf32>
    %18 = arith.divf %16, %17 : vector<16x1xf32>
    %cst_11 = arith.constant 9.99999996E-13 : f32
    %19 = vector.broadcast %cst_11 : f32 to vector<16x1xf32>
    %20 = arith.addf %18, %19 : vector<16x1xf32>
    %21 = math.rsqrt %20 : vector<16x1xf32>
    %22 = vector.broadcast %21 : vector<16x1xf32> to vector<16x32xf32>
    %23 = arith.mulf %13, %22 : vector<16x32xf32>
    %c0_12 = arith.constant 0 : index
    %c0_13 = arith.constant 0 : index
    %24 = vector.load %arg5[%c0_12, %c0_13] : memref<1x32xf32, #tpu.memory_space<vmem>>, vector<1x32xf32>
    %25 = vector.broadcast %24 : vector<1x32xf32> to vector<16x32xf32>
    %26 = arith.mulf %23, %25 : vector<16x32xf32>
    %c0_14 = arith.constant 0 : index
    %c0_15 = arith.constant 0 : index
    %27 = vector.load %arg6[%c0_14, %c0_15] : memref<1x32xf32, #tpu.memory_space<vmem>>, vector<1x32xf32>
    %28 = vector.broadcast %27 : vector<1x32xf32> to vector<16x32xf32>
    %29 = arith.addf %26, %28 : vector<16x32xf32>
    %c0_16 = arith.constant 0 : index
    %c0_17 = arith.constant 0 : index
    %30 = vector.load %arg7[%c0_16, %c0_17] : memref<16x32xf32, #tpu.memory_space<vmem>>, vector<16x32xf32>
    tpu.vector_store %arg7[%c0_16, %c0_17], %29 {strides = array<i32>} : memref<16x32xf32, #tpu.memory_space<vmem>>, vector<16x32xf32>,
    return
  }
  func.func @transform_0(%arg0: i32) -> (i32, i32) {
    %c0_i32 = arith.constant 0 : i32
    %c0_i32_0 = arith.constant 0 : i32
    return %arg0, %c0_i32 : i32, i32
  }
  func.func @transform_1(%arg0: i32) -> (i32, i32) {
    %c0_i32 = arith.constant 0 : i32
    %c0_i32_0 = arith.constant 0 : i32
    return %arg0, %c0_i32 : i32, i32
  }
  func.func @transform_2(%arg0: i32) -> (i32, i32) {
    %c0_i32 = arith.constant 0 : i32
    %c0_i32_0 = arith.constant 0 : i32
    %c0_i32_1 = arith.constant 0 : i32
    return %c0_i32, %c0_i32_0 : i32, i32
  }
  func.func @transform_3(%arg0: i32) -> (i32, i32) {
    %c0_i32 = arith.constant 0 : i32
    %c0_i32_0 = arith.constant 0 : i32
    %c0_i32_1 = arith.constant 0 : i32
    return %c0_i32, %c0_i32_0 : i32, i32
  }
  func.func @transform_4(%arg0: i32) -> (i32, i32) {
    %c0_i32 = arith.constant 0 : i32
    %c0_i32_0 = arith.constant 0 : i32
    %c0_i32_1 = arith.constant 0 : i32
    return %c0_i32, %c0_i32_0 : i32, i32
  }
  func.func @transform_5(%arg0: i32) -> (i32, i32) {
    %c0_i32 = arith.constant 0 : i32
    %c0_i32_0 = arith.constant 0 : i32
    %c0_i32_1 = arith.constant 0 : i32
    return %c0_i32, %c0_i32_0 : i32, i32
  }
  func.func @transform_6(%arg0: i32) -> (i32, i32) {
    %c0_i32 = arith.constant 0 : i32
    %c0_i32_0 = arith.constant 0 : i32
    return %arg0, %c0_i32 : i32, i32
  }
}

</mosaic_0001>

<llo_original>
// kernel: tpu_custom_call.1
$region0: #{tpu_custom_call.1}
  #allocation0 [shape = 'u32[]', space=smem, size = 0x4, offset = 0x4, fixed_abs, tag = 'smem constant byte address 0x4 - core index']
  #allocation1 [shape = 'u32[144,128]{1,0:T(1,128)}', space=vmem, size = 0x12000, scoped, tag = 'internal scratch']
  %s0 = inlined_call_operand.hbm [shape: bf16[16,128], index: 0, kind: input, shape index: {}]
  %s1 = inlined_call_operand.hbm [shape: f32[16,32], index: 1, kind: input, shape index: {}]
  %s2 = inlined_call_operand.hbm [shape: bf16[128,32], index: 2, kind: input, shape index: {}]
  %s3 = inlined_call_operand.hbm [shape: f32[1,32], index: 3, kind: input, shape index: {}]
  %s4 = inlined_call_operand.hbm [shape: f32[1,32], index: 4, kind: input, shape index: {}]
  %s5 = inlined_call_operand.hbm [shape: f32[1,32], index: 5, kind: input, shape index: {}]
  %s6 = inlined_call_operand.hbm [shape: f32[16,32], index: 6, kind: output, shape index: {}]
  %s7 = sld [smem:[#allocation0]]
  $region58: #{tpu_custom_call.1} parent=0
    _
  %s9 = ssub.s32 1, %s7
  %s10 = scalar_select 0, %s9, %s7
  $region1: #{tpu_custom_call.1} parent=0
    #allocation2 [shape = 'u8[4096]{0}', space=vmem, size = 0x1000, scoped, tag = 'input window, operand 0, single buffered']
    #allocation3 [shape = 's32[1]{0}', space=sflag, size = 0x4, scoped, tag = 'scoped memory for tpu_custom_call.1']
    #allocation4 [shape = 's32[1]{0}', space=sflag, size = 0x4, scoped, tag = 'scoped memory for tpu_custom_call.1']
    #allocation5 [shape = 'u8[8192]{0}', space=vmem, size = 0x2000, scoped, tag = 'input window, operand 1, single buffered']
    #allocation6 [shape = 's32[1]{0}', space=sflag, size = 0x4, scoped, tag = 'scoped memory for tpu_custom_call.1']
    #allocation7 [shape = 'u8[32768]{0}', space=vmem, size = 0x8000, scoped, tag = 'input window, operand 2, single buffered']
    #allocation8 [shape = 'u8[512]{0}', space=vmem, size = 0x400, scoped, tag = 'input window, operand 3, single buffered']
    #allocation9 [shape = 's32[1]{0}', space=sflag, size = 0x4, scoped, tag = 'scoped memory for tpu_custom_call.1']
    #allocation10 [shape = 'u8[512]{0}', space=vmem, size = 0x400, scoped, tag = 'input window, operand 4, single buffered']
    #allocation11 [shape = 'u8[512]{0}', space=vmem, size = 0x400, scoped, tag = 'input window, operand 5, single buffered']
    #allocation12 [shape = 's32[1]{0}', space=sflag, size = 0x4, scoped, tag = 'scoped memory for tpu_custom_call.1']
    #allocation13 [shape = 'u8[8192]{0}', space=vmem, size = 0x2000, scoped, tag = 'output window, operand 0, single buffered']
    %11 = vsyncpa [#allocation3], 0
    %12 = vsyncpa [#allocation6], 0
    %13 = vsyncpa [#allocation9], 0
    %14 = vsyncpa [#allocation12], 0
    %15 = vsyncpa [#allocation4], 0
    // Predicated region
    $region2: #{tpu_custom_call.1} parent=1 // pred_check
      _
    $region3: #{tpu_custom_call.1} parent=1 // pred_check_branch
      %17 = sbr.rel (0) target = $region5
    $region4: #{tpu_custom_call.1} parent=1 // pred_region
      %s19 = ssub.s32 128, 128
      %20 = vsyncadd [#allocation3], %s19
      %s21 = sshll.u32 [#allocation2], 4
      %s22 = int_to_ptr.vmem [resolvable:$true] %s21
      %27 = dma.hbm_to_vmem [thread:$0]  %s0, 128, %s22, [#allocation3], 64, 64, 4
    $region5: #{tpu_custom_call.1} parent=1 // pred_fallthru
      _
    // Predicated region
    $region6: #{tpu_custom_call.1} parent=1 // pred_check
      _
    $region7: #{tpu_custom_call.1} parent=1 // pred_check_branch
      %29 = sbr.rel (0) target = $region9
    $region8: #{tpu_custom_call.1} parent=1 // pred_region
      %s31 = ssub.s32 256, 256
      %32 = vsyncadd [#allocation6], %s31
      %s33 = sshll.u32 [#allocation5], 4
      %s34 = int_to_ptr.vmem [resolvable:$true] %s33
      %39 = dma.hbm_to_vmem [thread:$0]  %s1, 256, %s34, [#allocation6], 128, 128, 8
    $region9: #{tpu_custom_call.1} parent=1 // pred_fallthru
      _
    // Predicated region
    $region10: #{tpu_custom_call.1} parent=1 // pred_check
      _
    $region11: #{tpu_custom_call.1} parent=1 // pred_check_branch
      %41 = sbr.rel (0) target = $region13
    $region12: #{tpu_custom_call.1} parent=1 // pred_region
      %s43 = ssub.s32 1024, 1024
      %44 = vsyncadd [#allocation6], %s43
      %s45 = sshll.u32 [#allocation7], 4
      %s46 = int_to_ptr.vmem [resolvable:$true] %s45
      %51 = dma.hbm_to_vmem [thread:$0]  %s2, 1024, %s46, [#allocation6], 64, 64, 4
    $region13: #{tpu_custom_call.1} parent=1 // pred_fallthru
      _
    // Predicated region
    $region14: #{tpu_custom_call.1} parent=1 // pred_check
      _
    $region15: #{tpu_custom_call.1} parent=1 // pred_check_branch
      %53 = sbr.rel (0) target = $region17
    $region16: #{tpu_custom_call.1} parent=1 // pred_region
      %s55 = ssub.s32 16, 16
      %56 = vsyncadd [#allocation9], %s55
      %s58 = sshll.u32 [#allocation8], 4
      %s59 = int_to_ptr.vmem [resolvable:$true] %s58
      %61 = dma.hbm_to_vmem [thread:$0]  %s3, 16, %s59, [#allocation9]
    $region17: #{tpu_custom_call.1} parent=1 // pred_fallthru
      _
    // Predicated region
    $region18: #{tpu_custom_call.1} parent=1 // pred_check
      _
    $region19: #{tpu_custom_call.1} parent=1 // pred_check_branch
      %63 = sbr.rel (0) target = $region21
    $region20: #{tpu_custom_call.1} parent=1 // pred_region
      %s65 = ssub.s32 16, 16
      %66 = vsyncadd [#allocation9], %s65
      %s68 = sshll.u32 [#allocation10], 4
      %s69 = int_to_ptr.vmem [resolvable:$true] %s68
      %71 = dma.hbm_to_vmem [thread:$0]  %s4, 16, %s69, [#allocation9]
    $region21: #{tpu_custom_call.1} parent=1 // pred_fallthru
      _
    // Predicated region
    $region22: #{tpu_custom_call.1} parent=1 // pred_check
      _
    $region23: #{tpu_custom_call.1} parent=1 // pred_check_branch
      %73 = sbr.rel (0) target = $region25
    $region24: #{tpu_custom_call.1} parent=1 // pred_region
      %s75 = ssub.s32 16, 16
      %76 = vsyncadd [#allocation12], %s75
      %s78 = sshll.u32 [#allocation11], 4
      %s79 = int_to_ptr.vmem [resolvable:$true] %s78
      %81 = dma.hbm_to_vmem [thread:$0]  %s5, 16, %s79, [#allocation12]
    $region25: #{tpu_custom_call.1} parent=1 // pred_fallthru
      _
    // Predicated region
    $region26: #{tpu_custom_call.1} parent=1 // pred_check
      _
    $region27: #{tpu_custom_call.1} parent=1 // pred_check_branch
      %83 = sbr.rel (0) target = $region29
    $region28: #{tpu_custom_call.1} parent=1 // pred_region
      %84 = dma.done [#allocation3], 128
    $region29: #{tpu_custom_call.1} parent=1 // pred_fallthru
      _
    // Predicated region
    $region30: #{tpu_custom_call.1} parent=1 // pred_check
      _
    $region31: #{tpu_custom_call.1} parent=1 // pred_check_branch
      %86 = sbr.rel (0) target = $region33
    $region32: #{tpu_custom_call.1} parent=1 // pred_region
      %87 = dma.done [#allocation6], 256
    $region33: #{tpu_custom_call.1} parent=1 // pred_fallthru
      _
    // Predicated region
    $region34: #{tpu_custom_call.1} parent=1 // pred_check
      _
    $region35: #{tpu_custom_call.1} parent=1 // pred_check_branch
      %89 = sbr.rel (0) target = $region37
    $region36: #{tpu_custom_call.1} parent=1 // pred_region
      %90 = dma.done [#allocation6], 1024
    $region37: #{tpu_custom_call.1} parent=1 // pred_fallthru
      _
    // Predicated region
    $region38: #{tpu_custom_call.1} parent=1 // pred_check
      _
    $region39: #{tpu_custom_call.1} parent=1 // pred_check_branch
      %92 = sbr.rel (0) target = $region41
    $region40: #{tpu_custom_call.1} parent=1 // pred_region
      %93 = dma.done [#allocation9], 16
    $region41: #{tpu_custom_call.1} parent=1 // pred_fallthru
      _
    // Predicated region
    $region42: #{tpu_custom_call.1} parent=1 // pred_check
      _
    $region43: #{tpu_custom_call.1} parent=1 // pred_check_branch
      %95 = sbr.rel (0) target = $region45
    $region44: #{tpu_custom_call.1} parent=1 // pred_region
      %96 = dma.done [#allocation9], 16
    $region45: #{tpu_custom_call.1} parent=1 // pred_fallthru
      _
    // Predicated region
    $region46: #{tpu_custom_call.1} parent=1 // pred_check
      _
    $region47: #{tpu_custom_call.1} parent=1 // pred_check_branch
      %98 = sbr.rel (0) target = $region49
    $region48: #{tpu_custom_call.1} parent=1 // pred_region
      %99 = dma.done [#allocation12], 16
    $region49: #{tpu_custom_call.1} parent=1 // pred_fallthru
      _
    %v101 = vld [vmem:[#allocation2] sm:$0xf]
    %v102 = vld [vmem:[#allocation2 + $0x4] sm:$0xf]
    %v103 = vld [vmem:[#allocation7] sm:$0xf]
    %v104 = vld [vmem:[#allocation7 + $0x4] sm:$0xf]
    %v105 = vld [vmem:[#allocation7 + $0x8] sm:$0xf]
    %v106 = vld [vmem:[#allocation7 + $0xc] sm:$0xf]
    %v107 = vld [vmem:[#allocation7 + $0x10] sm:$0xf]
    %v108 = vld [vmem:[#allocation7 + $0x14] sm:$0xf]
    %v109 = vld [vmem:[#allocation7 + $0x18] sm:$0xf]
    %v110 = vld [vmem:[#allocation7 + $0x1c] sm:$0xf]
    %v111 = vld [vmem:[#allocation7 + $0x20] sm:$0xf]
    %v112 = vld [vmem:[#allocation7 + $0x24] sm:$0xf]
    %v113 = vld [vmem:[#allocation7 + $0x28] sm:$0xf]
    %v114 = vld [vmem:[#allocation7 + $0x2c] sm:$0xf]
    %v115 = vld [vmem:[#allocation7 + $0x30] sm:$0xf]
    %v116 = vld [vmem:[#allocation7 + $0x34] sm:$0xf]
    %v117 = vld [vmem:[#allocation7 + $0x38] sm:$0xf]
    %v118 = vld [vmem:[#allocation7 + $0x3c] sm:$0xf]
    %v119 = vld [vmem:[#allocation8] sm:$0x1]
    %v121 = vlaneseq
    %v122 = vshrl.u32 %v121, 7
    %v123 = vsub.s32 0, %v122
    %v124 = vrot.slane %v119, %v123
    %v128 = vunpack.c.l.b16 %v101
    %v129 = vunpack.c.l.b16 %v102
    %v130 = vpack.c.b16 %v129, %v128
    %v148 = vunpack.c.l.b16 %v103
    %v149 = vunpack.c.l.b16 %v104
    %v150 = vunpack.c.l.b16 %v105
    %v151 = vunpack.c.l.b16 %v106
    %v152 = vunpack.c.l.b16 %v107
    %v153 = vunpack.c.l.b16 %v108
    %v154 = vunpack.c.l.b16 %v109
    %v155 = vunpack.c.l.b16 %v110
    %v156 = vunpack.c.l.b16 %v111
    %v157 = vunpack.c.l.b16 %v112
    %v158 = vunpack.c.l.b16 %v113
    %v159 = vunpack.c.l.b16 %v114
    %v160 = vunpack.c.l.b16 %v115
    %v161 = vunpack.c.l.b16 %v116
    %v162 = vunpack.c.l.b16 %v117
    %v163 = vunpack.c.l.b16 %v118
    %v164 = vpack.c.b16 %v149, %v148
    %v165 = vpack.c.b16 %v151, %v150
    %v166 = vpack.c.b16 %v153, %v152
    %v167 = vpack.c.b16 %v155, %v154
    %v168 = vpack.c.b16 %v157, %v156
    %v169 = vpack.c.b16 %v159, %v158
    %v170 = vpack.c.b16 %v161, %v160
    %v171 = vpack.c.b16 %v163, %v162
    %180 = vmatprep.subr.bf16.mxu0 0
    %181 = vmatpush1.bf16.msra.mxu0 %v164
    %182 = vmatprep.subr.bf16.mxu0 0
    %183 = vmatpush1.bf16.msra.mxu0 %v165
    %184 = vmatprep.subr.bf16.mxu0 0
    %185 = vmatpush1.bf16.msra.mxu0 %v166
    %186 = vmatprep.subr.bf16.mxu0 0
    %187 = vmatpush1.bf16.msra.mxu0 %v167
    %188 = vmatprep.subr.bf16.mxu0 0
    %189 = vmatpush1.bf16.msra.mxu0 %v168
    %190 = vmatprep.subr.bf16.mxu0 0
    %191 = vmatpush1.bf16.msra.mxu0 %v169
    %192 = vmatprep.subr.bf16.mxu0 0
    %193 = vmatpush1.bf16.msra.mxu0 %v170
    %194 = vmatprep.subr.bf16.mxu0 0
    %195 = vmatpush1.bf16.msra.mxu0 %v171
    %196 = vmatprep.subr.bf16.mxu0 0
    %197 = vmatpush1.bf16.msra.mxu0 0
    %198 = vmatprep.subr.bf16.mxu0 0
    %199 = vmatpush1.bf16.msra.mxu0 0
    %200 = vmatprep.subr.bf16.mxu0 0
    %201 = vmatpush1.bf16.msra.mxu0 0
    %202 = vmatprep.subr.bf16.mxu0 0
    %203 = vmatpush1.bf16.msra.mxu0 0
    %204 = vmatprep.subr.bf16.mxu0 0
    %205 = vmatpush1.bf16.msra.mxu0 0
    %206 = vmatprep.subr.bf16.mxu0 0
    %207 = vmatpush1.bf16.msra.mxu0 0
    %208 = vmatprep.subr.bf16.mxu0 0
    %209 = vmatpush1.bf16.msra.mxu0 0
    %210 = vmatprep.subr.bf16.mxu0 0
    %211 = vmatpush1.bf16.msra.mxu0 0
    %212 = vmatprep.mubr.bf16.mxu0 0
    %213 = vmatmul.mubr.bf16.gmra.mrb[0].mxu0 %v130
    %v214 = vpop.f32.mrb[0].mxu0
    %v215 = vadd.f32 %v124, %v214
    %v216 = vpop.f32.mrb[0].mxu0
    %v217 = vpop.f32.mrb[0].mxu0
    %v218 = vadd.f32 %v124, %v217
    %v219 = vpop.f32.mrb[0].mxu0
    %220 = vdwg.mxu0
    %v221 = vld [vmem:[#allocation5] sm:$0xff]
    %v222 = vld [vmem:[#allocation5 + $0x8] sm:$0xff]
    %v223 = vadd.f32 %v215, %v221
    %v224 = vadd.f32 %v218, %v222
    %vm225 = vcmask 261120
    %v226 = vsel %vm225, %v223, 0.0
    %227 = vadd.xlane.f32.xlu0 %v226
    %v228 = vpop.xlane.xlu0 %227
    %v229 = vsel %vm225, %v224, 0.0
    %230 = vadd.xlane.f32.xlu0 %v229
    %v231 = vpop.xlane.xlu0 %230
    %v232 = vrcp.pop 32.0
    %v233 = vmul.f32 %v228, %v232
    %v234 = vmul.f32 %v231, %v232
    %v235 = vsub.f32 %v223, %v233
    %v236 = vsub.f32 %v224, %v234
    %v237 = vmul.f32 %v235, %v235
    %v238 = vmul.f32 %v236, %v236
    %v239 = vsel %vm225, %v237, 0.0
    %240 = vadd.xlane.f32.xlu0 %v239
    %v241 = vpop.xlane.xlu0 %240
    %v242 = vsel %vm225, %v238, 0.0
    %243 = vadd.xlane.f32.xlu0 %v242
    %v244 = vpop.xlane.xlu0 %243
    %v245 = vmul.f32 %v241, %v232
    %v246 = vmul.f32 %v244, %v232
    %v247 = vadd.f32 %v245, 1e-12
    %v248 = vadd.f32 %v246, 1e-12
    %v249 = vrsqrt.pop %v247
    %v250 = vrsqrt.pop %v248
    %v251 = vmul.f32 %v235, %v249
    %v252 = vmul.f32 %v236, %v250
    %v253 = vld [vmem:[#allocation10] sm:$0x1]
    %v255 = vlaneseq
    %v256 = vshrl.u32 %v255, 7
    %v257 = vsub.s32 0, %v256
    %v258 = vrot.slane %v253, %v257
    %v260 = vmul.f32 %v251, %v258
    %v261 = vmul.f32 %v252, %v258
    %v262 = vld [vmem:[#allocation11] sm:$0x1]
    %v264 = vlaneseq
    %v265 = vshrl.u32 %v264, 7
    %v266 = vsub.s32 0, %v265
    %v267 = vrot.slane %v262, %v266
    %v269 = vadd.f32 %v260, %v267
    %v270 = vadd.f32 %v261, %v267
    %271 = vst.msk [vmem:[#allocation13] sm:$0xff] %vm225, %v269
    %272 = vst.msk [vmem:[#allocation13 + $0x8] sm:$0xff] %vm225, %v270
    // Predicated region
    $region50: #{tpu_custom_call.1} parent=1 // pred_check
      _
    $region51: #{tpu_custom_call.1} parent=1 // pred_check_branch
      %274 = sbr.rel (0) target = $region53
    $region52: #{tpu_custom_call.1} parent=1 // pred_region
      %s276 = ssub.s32 256, 256
      %277 = vsyncadd [#allocation4], %s276
      %s278 = sshll.u32 [#allocation13], 4
      %s279 = int_to_ptr.vmem [resolvable:$true] %s278
      %284 = dma.vmem_to_hbm [thread:$0]  %s279, 256, %s6, [#allocation4], 128, 128, 8
    $region53: #{tpu_custom_call.1} parent=1 // pred_fallthru
      _
    // Predicated region
    $region54: #{tpu_custom_call.1} parent=1 // pred_check
      _
    $region55: #{tpu_custom_call.1} parent=1 // pred_check_branch
      %286 = sbr.rel (0) target = $region57
    $region56: #{tpu_custom_call.1} parent=1 // pred_region
      %287 = dma.done [#allocation4], 256
    $region57: #{tpu_custom_call.1} parent=1 // pred_fallthru
      _
    %288 = vsyncpa [#allocation3], 1
    %289 = vsyncpa [#allocation6], 1
    %290 = vsyncpa [#allocation9], 1
    %291 = vsyncpa [#allocation12], 1
    %292 = vsyncpa [#allocation4], 1

</llo_original>
